<compile_context>
chip_gen: v7x
topology: tpu7x:2x2x1
jax: 0.10.0
libtpu: 0.0.40
codegen_flags: <defaults>
</compile_context>

<pallas_src>
import functools

import jax
import jax.numpy as jnp
from jax import lax
from jax.experimental import pallas as pl
from jax.experimental.pallas import tpu as pltpu

KSIZE = 7
PAD = KSIZE // 2   # 3
NACC = 4           # independent partial accumulators (roll path)


# ----------------------------------------------------------------------------
# MXU path: conv as matmul against a precomputed banded matrix.
# ----------------------------------------------------------------------------
def _conv_matrix(weight, H, W):
    """weight (1, 2, 7, 7) -> km (2, HW, HW) with conv_flat = avg@km[0] + max@km[1]."""
    HW = H * W
    w = weight.reshape(2, KSIZE * KSIZE).astype(jnp.float32)
    row = jnp.repeat(jnp.arange(H, dtype=jnp.int32), W)            # (HW,)
    col = jnp.tile(jnp.arange(W, dtype=jnp.int32), H)              # (HW,)
    # Tap indices: ky = row_src - row_dst + PAD, kx = col_src - col_dst + PAD.
    ky = row[:, None] - row[None, :] + PAD                         # (src, dst)
    kx = col[:, None] - col[None, :] + PAD
    valid = (ky >= 0) & (ky < KSIZE) & (kx >= 0) & (kx < KSIZE)
    idx = jnp.clip(ky, 0, KSIZE - 1) * KSIZE + jnp.clip(kx, 0, KSIZE - 1)
    return jnp.where(valid[None, :, :], w[:, idx], 0.0)            # (2, HW, HW)


def _sa_matmul_kernel(x_ref, km_ref, b_ref, o_ref):
    # x_ref : (nb, C, HW)   VMEM, lane-dense spatial plane
    # km_ref: (2, HW, HW)   VMEM, resident conv operator (avg / max channel)
    # b_ref : (1,)          SMEM, conv bias
    # o_ref : (1, nb, HW)   VMEM output block
    x = x_ref[...].astype(jnp.float32)                 # (nb, C, HW)
    nb, hw = x.shape[0], x.shape[2]
    avg = jnp.mean(x, axis=1)                          # (nb, HW)
    mx = jnp.max(x, axis=1)                            # (nb, HW)

    # Pad the (possibly tiny) M dimension up to a sublane multiple for the MXU.
    m = -(-nb // 8) * 8
    if m != nb:
        z = jnp.zeros((m - nb, hw), jnp.float32)
        avg = jnp.concatenate([avg, z], axis=0)
        mx = jnp.concatenate([mx, z], axis=0)

    conv = (jnp.dot(avg, km_ref[0], preferred_element_type=jnp.float32)
            + jnp.dot(mx, km_ref[1], preferred_element_type=jnp.float32))
    conv = conv[:nb, :] + b_ref[0]
    o_ref[...] = jax.nn.sigmoid(conv)[None].astype(o_ref.dtype)


# ----------------------------------------------------------------------------
# Roll path: 49 taps via pltpu.roll + boundary masks (large feature maps).
# ----------------------------------------------------------------------------
def _sa_roll_kernel(x_ref, rc_ref, w_ref, b_ref, o_ref, *, nb, H, W):
    # x_ref : (nb, C, HW) VMEM;  rc_ref: (2, HW) int32 row/col of each flat pos
    # w_ref : (98,) SMEM flattened conv weight;  b_ref: (1,) SMEM bias
    # o_ref : (1, nb, HW) VMEM output block
    HW = H * W
    x = x_ref[...].astype(jnp.float32)                 # (nb, C, HW)
    avg = jnp.mean(x, axis=1)                          # (nb, HW)
    mx = jnp.max(x, axis=1)                            # (nb, HW)
    # Stack both conv input channels along sublanes: rows [0,nb)=avg, [nb,2nb)=max,
    # so every roll / MAC below processes both channels with one instruction.
    p = jnp.concatenate([avg, mx], axis=0)             # (2*nb, HW)

    row = rc_ref[0:1, :]                               # (1, HW)  i // W
    col = rc_ref[1:2, :]                               # (1, HW)  i %  W
    row_ok = [(row >= PAD - dy) & (row < H + PAD - dy) for dy in range(KSIZE)]
    col_ok = [(col >= PAD - dx) & (col < W + PAD - dx) for dx in range(KSIZE)]

    # Per-tap per-channel weights as tiny (2*nb, 1) columns (hoisted).
    is_max_col = lax.broadcasted_iota(jnp.int32, (2 * nb, 1), 0) >= nb
    wcols = [jnp.where(is_max_col, w_ref[KSIZE * KSIZE + t], w_ref[t])
             for t in range(KSIZE * KSIZE)]

    accs = [jnp.zeros((2 * nb, HW), jnp.float32) for _ in range(NACC)]
    for dy in range(KSIZE):
        for dx in range(KSIZE):
            t = dy * KSIZE + dx
            off = (dy - PAD) * W + (dx - PAD)
            k = (-off) % HW                            # tap[i] = p[i + off]
            rolled = pltpu.roll(p, k, 1) if k else p
            tap = jnp.where(row_ok[dy] & col_ok[dx], rolled, 0.0)
            accs[t % NACC] = accs[t % NACC] + tap * wcols[t]

    acc = accs[0]
    for a in accs[1:]:
        acc = acc + a                                  # (2*nb, HW)
    conv = acc[:nb, :] + acc[nb:, :] + b_ref[0]        # fold channels + bias
    o_ref[...] = jax.nn.sigmoid(conv)[None].astype(o_ref.dtype)


# ----------------------------------------------------------------------------
# Wrapper
# ----------------------------------------------------------------------------
def spatial_attention(x, weight, bias, *, block_n=None,
                      vmem_budget_bytes=4 << 20,
                      matmul_path=None, matmul_km_budget_bytes=4 << 20):
    """x: (N, C, H, W); weight: (1, 2, 7, 7); bias: (1,). Returns (N, 1, H, W)."""
    N, C, H, W = x.shape
    HW = H * W

    x_flat = x.reshape(N, C, HW)                       # free view, lane-dense
    b = jnp.asarray(bias, jnp.float32).reshape(1)

    # Images per grid step: as many as fit a conservative VMEM budget
    # (double-buffered input block + f32 working set), so per-step overhead
    # amortizes and DMAs stay large.  Conservative enough for v7x (64 MiB).
    if block_n is None:
        per_img = C * HW * (2 * x.dtype.itemsize + 4) + 16 * HW * 4
        nb = int(max(1, min(N, vmem_budget_bytes // max(per_img, 1))))
        while N % nb:
            nb -= 1
    else:
        nb = int(block_n)
    grid_n = N // nb

    km_bytes = 2 * HW * HW * 4
    if matmul_path is None:
        matmul_path = km_bytes <= matmul_km_budget_bytes

    common = dict(
        out_shape=jax.ShapeDtypeStruct((grid_n, nb, HW), x.dtype),
        grid=(grid_n,),
        out_specs=pl.BlockSpec((1, nb, HW), lambda n: (n, 0, 0)),
        compiler_params=pltpu.CompilerParams(dimension_semantics=("parallel",)),
    )

    if matmul_path:
        km = _conv_matrix(weight, H, W)                # (2, HW, HW) f32, resident
        out = pl.pallas_call(
            _sa_matmul_kernel,
            in_specs=[
                pl.BlockSpec((nb, C, HW), lambda n: (n, 0, 0)),
                pl.BlockSpec((2, HW, HW), lambda n: (0, 0, 0)),
                pl.BlockSpec(memory_space=pltpu.MemorySpace.SMEM),
            ],
            **common,
        )(x_flat, km, b)
    else:
        # Row / column index of each flattened spatial position (for masks).
        rc = jnp.stack(
            [jnp.repeat(jnp.arange(H, dtype=jnp.int32), W),
             jnp.tile(jnp.arange(W, dtype=jnp.int32), H)], axis=0)   # (2, HW)
        w_flat = weight.reshape(-1).astype(jnp.float32)              # (98,)
        kernel = functools.partial(_sa_roll_kernel, nb=nb, H=H, W=W)
        out = pl.pallas_call(
            kernel,
            in_specs=[
                pl.BlockSpec((nb, C, HW), lambda n: (n, 0, 0)),
                pl.BlockSpec((2, HW), lambda n: (0, 0)),
                pl.BlockSpec(memory_space=pltpu.MemorySpace.SMEM),
                pl.BlockSpec(memory_space=pltpu.MemorySpace.SMEM),
            ],
            **common,
        )(x_flat, rc, w_flat, b)

    return out.reshape(N, 1, H, W)


def spatial_attention_ref(x, weight, bias):
    """Pure-JAX f32 reference matching the PyTorch module."""
    avg = jnp.mean(x, axis=1, keepdims=True)
    mx = jnp.max(x, axis=1, keepdims=True)
    xc = jnp.concatenate([avg, mx], axis=1)            # (N, 2, H, W)
    y = lax.conv_general_dilated(
        xc, weight,
        window_strides=(1, 1),
        padding=((PAD, PAD), (PAD, PAD)),
        dimension_numbers=("NCHW", "OIHW", "NCHW"),
        precision=lax.Precision.HIGHEST,
    )
    return jax.nn.sigmoid(y + bias.reshape(1, 1, 1, 1))


if __name__ == "__main__":
    key = jax.random.PRNGKey(0)
    kx, kw, kb = jax.random.split(key, 3)

    N, C, H, W = 2, 4, 16, 16
    x = jax.random.normal(kx, (N, C, H, W), dtype=jnp.float32)

    # Deterministic parameter init (synthetic; kaiming-uniform-like bound).
    fan_in = 2 * KSIZE * KSIZE
    bound = 1.0 / (fan_in ** 0.5)
    weight = jax.random.uniform(kw, (1, 2, KSIZE, KSIZE),
                                minval=-bound, maxval=bound, dtype=jnp.float32)
    bias = jax.random.uniform(kb, (1,), minval=-bound, maxval=bound,
                              dtype=jnp.float32)

    ref = spatial_attention_ref(x, weight, bias)

    # MXU path (the default at this shape).  Tolerance covers possible
    # reduced-precision bf16 passes in the backend's default f32 matmul.
    out_mm = jax.block_until_ready(spatial_attention(x, weight, bias,
                                                     matmul_path=True))
    assert out_mm.shape == (N, 1, H, W)
    assert jnp.allclose(out_mm, ref, atol=2e-3, rtol=2e-3), "matmul path mismatch"

    # Roll path (fallback for large feature maps) is exact f32 — tight check.
    out_roll = jax.block_until_ready(spatial_attention(x, weight, bias,
                                                       matmul_path=False))
    assert out_roll.shape == (N, 1, H, W)
    assert jnp.allclose(out_roll, ref, atol=1e-5, rtol=1e-5), "roll path mismatch"

    print("KERNEL_OK")
</pallas_src>

<mosaic_0001>
module attributes {stable_mosaic.version = 11 : i64} {
  func.func @_sa_matmul_kernel(%arg0: i32, %arg1: memref<2x4x256xf32, #tpu.memory_space<vmem>>, %arg2: memref<2x256x256xf32, #tpu.memory_space<vmem>>, %arg3: memref<1xf32, #tpu.memory_space<smem>>, %arg4: memref<1x2x256xf32, #tpu.memory_space<vmem>>) attributes {dimension_semantics = [#tpu.dimension_semantics<parallel>], iteration_bounds = array<i64: 1>, scalar_prefetch = 0 : i64, scratch_operands = 0 : i64, tpu.core_type = #tpu.core_type<tc>, window_params = [{transform_indices = @transform_0, window_bounds = array<i64: 2, 4, 256>}, {pipeline_mode = #tpu.pipeline_mode<synchronous>, transform_indices = @transform_1, window_bounds = array<i64: 2, 256, 256>}, {transform_indices = @transform_2, window_bounds = array<i64: 1>}, {transform_indices = @transform_3, window_bounds = array<i64: 1, 2, 256>}]} {
    %c0 = arith.constant 0 : index
    %c0_0 = arith.constant 0 : index
    %c0_1 = arith.constant 0 : index
    %0 = vector.load %arg1[%c0, %c0_0, %c0_1] : memref<2x4x256xf32, #tpu.memory_space<vmem>>, vector<2x4x256xf32>
    %cst = arith.constant dense<0.000000e+00> : vector<2x256xf32>
    %1 = vector.multi_reduction <add>, %0, %cst [1] : vector<2x4x256xf32> to vector<2x256xf32>
    %cst_2 = arith.constant 4.000000e+00 : f32
    %2 = vector.broadcast %cst_2 : f32 to vector<2x256xf32>
    %3 = arith.divf %1, %2 : vector<2x256xf32>
    %cst_3 = arith.constant dense<0xFF800000> : vector<2x256xf32>
    %4 = vector.multi_reduction <maximumf>, %0, %cst_3 [1] : vector<2x4x256xf32> to vector<2x256xf32>
    %cst_4 = arith.constant 0.000000e+00 : f32
    %5 = vector.broadcast %cst_4 : f32 to vector<6x256xf32>
    %6 = tpu.concatenate %3, %5 in 0 : vector<2x256xf32>, vector<6x256xf32> -> vector<8x256xf32>
    %7 = tpu.concatenate %4, %5 in 0 : vector<2x256xf32>, vector<6x256xf32> -> vector<8x256xf32>
    %c0_5 = arith.constant 0 : index
    %c0_6 = arith.constant 0 : index
    %c0_7 = arith.constant 0 : index
    %8 = vector.load %arg2[%c0_5, %c0_6, %c0_7] : memref<2x256x256xf32, #tpu.memory_space<vmem>>, vector<1x256x256xf32>
    %9 = vector.shape_cast %8 : vector<1x256x256xf32> to vector<256x256xf32>
    %cst_8 = arith.constant dense<0.000000e+00> : vector<8x256xf32>
    %10 = tpu.matmul %6, %9, %cst_8 {dimension_numbers = #tpu.dot_dimension_numbers<[1], [0], [0], [1], [0, 0, 1, 1], [], []>} : vector<8x256xf32>, vector<256x256xf32>, vector<8x256xf32> -> vector<8x256xf32>
    %c1 = arith.constant 1 : index
    %c0_9 = arith.constant 0 : index
    %c0_10 = arith.constant 0 : index
    %11 = vector.load %arg2[%c1, %c0_9, %c0_10] : memref<2x256x256xf32, #tpu.memory_space<vmem>>, vector<1x256x256xf32>
    %12 = vector.shape_cast %11 : vector<1x256x256xf32> to vector<256x256xf32>
    %cst_11 = arith.constant dense<0.000000e+00> : vector<8x256xf32>
    %13 = tpu.matmul %7, %12, %cst_11 {dimension_numbers = #tpu.dot_dimension_numbers<[1], [0], [0], [1], [0, 0, 1, 1], [], []>} : vector<8x256xf32>, vector<256x256xf32>, vector<8x256xf32> -> vector<8x256xf32>
    %14 = arith.addf %10, %13 : vector<8x256xf32>
    %15 = vector.extract_strided_slice %14 {offsets = [0, 0], sizes = [2, 256], strides = [1, 1]} : vector<8x256xf32> to vector<2x256xf32>
    %c0_12 = arith.constant 0 : index
    %16 = memref.load %arg3[%c0_12] : memref<1xf32, #tpu.memory_space<smem>>
    %17 = vector.broadcast %16 : f32 to vector<2x256xf32>
    %18 = arith.addf %15, %17 : vector<2x256xf32>
    %19 = arith.negf %18 : vector<2x256xf32>
    %20 = math.exp %19 : vector<2x256xf32>
    %cst_13 = arith.constant 1.000000e+00 : f32
    %21 = vector.broadcast %cst_13 : f32 to vector<2x256xf32>
    %22 = arith.addf %21, %20 : vector<2x256xf32>
    %23 = arith.divf %21, %22 : vector<2x256xf32>
    %24 = vector.shape_cast %23 : vector<2x256xf32> to vector<1x2x256xf32>
    %c0_14 = arith.constant 0 : index
    %c0_15 = arith.constant 0 : index
    %c0_16 = arith.constant 0 : index
    %25 = vector.load %arg4[%c0_14, %c0_15, %c0_16] : memref<1x2x256xf32, #tpu.memory_space<vmem>>, vector<1x2x256xf32>
    tpu.vector_store %arg4[%c0_14, %c0_15, %c0_16], %24 {strides = array<i32>} : memref<1x2x256xf32, #tpu.memory_space<vmem>>, vector<1x2x256xf32>,
    return
  }
  func.func @transform_0(%arg0: i32) -> (i32, i32, i32) {
    %c0_i32 = arith.constant 0 : i32
    %c0_i32_0 = arith.constant 0 : i32
    %c0_i32_1 = arith.constant 0 : i32
    return %arg0, %c0_i32, %c0_i32_0 : i32, i32, i32
  }
  func.func @transform_1(%arg0: i32) -> (i32, i32, i32) {
    %c0_i32 = arith.constant 0 : i32
    %c0_i32_0 = arith.constant 0 : i32
    %c0_i32_1 = arith.constant 0 : i32
    %c0_i32_2 = arith.constant 0 : i32
    return %c0_i32, %c0_i32_0, %c0_i32_1 : i32, i32, i32
  }
  func.func @transform_2(%arg0: i32) -> i32 {
    %c0_i32 = arith.constant 0 : i32
    %c0_i32_0 = arith.constant 0 : i32
    return %c0_i32 : i32
  }
  func.func @transform_3(%arg0: i32) -> (i32, i32, i32) {
    %c0_i32 = arith.constant 0 : i32
    %c0_i32_0 = arith.constant 0 : i32
    %c0_i32_1 = arith.constant 0 : i32
    return %arg0, %c0_i32, %c0_i32_0 : i32, i32, i32
  }
}

</mosaic_0001>

<llo_original>
// kernel: tpu_custom_call.1
$region0: #{tpu_custom_call.1}
  #allocation0 [shape = 'u32[]', space=smem, size = 0x4, offset = 0x4, fixed_abs, tag = 'smem constant byte address 0x4 - core index']
  #allocation1 [shape = 'u32[144,128]{1,0:T(1,128)}', space=vmem, size = 0x12000, scoped, tag = 'internal scratch']
  #allocation2 [shape = 'f32[1]{0:T(128)S(6)}', space=smem, size = 0x200, scoped, tag = 'scoped memory for tpu_custom_call.1']
  %s0 = inlined_call_operand.hbm [shape: f32[2,4,256], index: 0, kind: input, shape index: {}]
  %s1 = inlined_call_operand.hbm [shape: f32[2,256,256], index: 1, kind: input, shape index: {}]
  %s2 = inlined_call_operand.<no memory space> [shape: f32[1], index: 2, kind: input, shape index: {}]
  %s3 = inlined_call_operand.hbm [shape: f32[1,2,256], index: 3, kind: output, shape index: {}]
  %s4 = sld [smem:[#allocation0]]
  $region30: #{tpu_custom_call.1} parent=0
    _
  %s6 = ssub.s32 1, %s4
  %s7 = scalar_select 0, %s6, %s4
  %8 = sst [smem:[#allocation2]] %s2
  $region1: #{tpu_custom_call.1} parent=0
    #allocation3 [shape = 'u8[8192]{0}', space=vmem, size = 0x2000, scoped, tag = 'input window, operand 0, single buffered']
    #allocation4 [shape = 's32[1]{0}', space=sflag, size = 0x4, scoped, tag = 'scoped memory for tpu_custom_call.1']
    #allocation5 [shape = 's32[1]{0}', space=sflag, size = 0x4, scoped, tag = 'scoped memory for tpu_custom_call.1']
    #allocation6 [shape = 'u8[524288]{0}', space=vmem, size = 0x80000, scoped, tag = 'input window, operand 1, single buffered']
    #allocation7 [shape = 's32[1]{0}', space=sflag, size = 0x4, scoped, tag = 'scoped memory for tpu_custom_call.1']
    #allocation8 [shape = 'u8[2048]{0}', space=vmem, size = 0x800, scoped, tag = 'output window, operand 0, single buffered']
    %9 = vsyncpa [#allocation4], 0
    %10 = vsyncpa [#allocation7], 0
    %11 = vsyncpa [#allocation5], 0
    // Predicated region
    $region2: #{tpu_custom_call.1} parent=1 // pred_check
      _
    $region3: #{tpu_custom_call.1} parent=1 // pred_check_branch
      %13 = sbr.rel (0) target = $region5
    $region4: #{tpu_custom_call.1} parent=1 // pred_region
      %s15 = ssub.s32 256, 256
      %16 = vsyncadd [#allocation4], %s15
      %s17 = sshll.u32 [#allocation3], 4
      %s18 = int_to_ptr.vmem [resolvable:$true] %s17
      %23 = dma.hbm_to_vmem [thread:$0]  %s0, 256, %s18, [#allocation4], 128, 128, 8
    $region5: #{tpu_custom_call.1} parent=1 // pred_fallthru
      _
    // Predicated region
    $region6: #{tpu_custom_call.1} parent=1 // pred_check
      _
    $region7: #{tpu_custom_call.1} parent=1 // pred_check_branch
      %25 = sbr.rel (0) target = $region9
    $region8: #{tpu_custom_call.1} parent=1 // pred_region
      %s27 = ssub.s32 16384, 16384
      %28 = vsyncadd [#allocation7], %s27
      %s29 = sshll.u32 [#allocation6], 4
      %s30 = int_to_ptr.vmem [resolvable:$true] %s29
      %35 = dma.hbm_to_vmem [thread:$0]  %s1, 16384, %s30, [#allocation7], 256, 256, 16
    $region9: #{tpu_custom_call.1} parent=1 // pred_fallthru
      _
    // Predicated region
    $region10: #{tpu_custom_call.1} parent=1 // pred_check
      _
    $region11: #{tpu_custom_call.1} parent=1 // pred_check_branch
      %37 = sbr.rel (0) target = $region13
    $region12: #{tpu_custom_call.1} parent=1 // pred_region
      _
    $region13: #{tpu_custom_call.1} parent=1 // pred_fallthru
      _
    // Predicated region
    $region14: #{tpu_custom_call.1} parent=1 // pred_check
      _
    $region15: #{tpu_custom_call.1} parent=1 // pred_check_branch
      %39 = sbr.rel (0) target = $region17
    $region16: #{tpu_custom_call.1} parent=1 // pred_region
      %40 = dma.done [#allocation4], 256
    $region17: #{tpu_custom_call.1} parent=1 // pred_fallthru
      _
    // Predicated region
    $region18: #{tpu_custom_call.1} parent=1 // pred_check
      _
    $region19: #{tpu_custom_call.1} parent=1 // pred_check_branch
      %42 = sbr.rel (0) target = $region21
    $region20: #{tpu_custom_call.1} parent=1 // pred_region
      %43 = dma.done [#allocation7], 16384
    $region21: #{tpu_custom_call.1} parent=1 // pred_fallthru
      _
    %v44 = vld [vmem:[#allocation3] sm:$0xff]
    %v45 = vld [vmem:[#allocation3 + $0x8] sm:$0xff]
    %v48 = vcombine.high %v44, %v44
    %v49 = vcombine.high %v45, %v45
    %vm52 = vcmask 1043456
    %v53 = vsel %vm52, %v44, 0.0
    %v54 = vrot.slane %v53, 4
    %v55 = vadd.f32 %v53, %v54
    %v56 = vrot.slane %v55, 2
    %v57 = vadd.f32 %v55, %v56
    %v58 = vrot.slane %v57, 1
    %v59 = vadd.f32 %v57, %v58
    %v60 = vsel %vm52, %v48, 0.0
    %v61 = vrot.slane %v60, 4
    %v62 = vadd.f32 %v60, %v61
    %v63 = vrot.slane %v62, 2
    %v64 = vadd.f32 %v62, %v63
    %v65 = vrot.slane %v64, 1
    %v66 = vadd.f32 %v64, %v65
    %v67 = vsel %vm52, %v45, 0.0
    %v68 = vrot.slane %v67, 4
    %v69 = vadd.f32 %v67, %v68
    %v70 = vrot.slane %v69, 2
    %v71 = vadd.f32 %v69, %v70
    %v72 = vrot.slane %v71, 1
    %v73 = vadd.f32 %v71, %v72
    %v74 = vsel %vm52, %v49, 0.0
    %v75 = vrot.slane %v74, 4
    %v76 = vadd.f32 %v74, %v75
    %v77 = vrot.slane %v76, 2
    %v78 = vadd.f32 %v76, %v77
    %v79 = vrot.slane %v78, 1
    %v80 = vadd.f32 %v78, %v79
    %v81 = vrcp.pop 4.0
    %v82 = vmul.f32 %v59, %v81
    %v83 = vmul.f32 %v66, %v81
    %v84 = vmul.f32 %v73, %v81
    %v85 = vmul.f32 %v80, %v81
    %v86 = vsel %vm52, %v44, -inf
    %v87 = vrot.slane %v86, 4
    %v88 = vmax.f32 %v86, %v87
    %v89 = vrot.slane %v88, 2
    %v90 = vmax.f32 %v88, %v89
    %v91 = vrot.slane %v90, 1
    %v92 = vmax.f32 %v90, %v91
    %v93 = vsel %vm52, %v48, -inf
    %v94 = vrot.slane %v93, 4
    %v95 = vmax.f32 %v93, %v94
    %v96 = vrot.slane %v95, 2
    %v97 = vmax.f32 %v95, %v96
    %v98 = vrot.slane %v97, 1
    %v99 = vmax.f32 %v97, %v98
    %v100 = vsel %vm52, %v45, -inf
    %v101 = vrot.slane %v100, 4
    %v102 = vmax.f32 %v100, %v101
    %v103 = vrot.slane %v102, 2
    %v104 = vmax.f32 %v102, %v103
    %v105 = vrot.slane %v104, 1
    %v106 = vmax.f32 %v104, %v105
    %v107 = vsel %vm52, %v49, -inf
    %v108 = vrot.slane %v107, 4
    %v109 = vmax.f32 %v107, %v108
    %v110 = vrot.slane %v109, 2
    %v111 = vmax.f32 %v109, %v110
    %v112 = vrot.slane %v111, 1
    %v113 = vmax.f32 %v111, %v112
    %vm118 = vcmask 1041409
    %v119 = vsel %vm118, %v84, %v82
    %v120 = vsel %vm118, %v85, %v83
    %vm123 = vcmask 1041408
    %v124 = vsel %vm123, %v119, 0.0
    %v125 = vsel %vm123, %v120, 0.0
    %v130 = vsel %vm118, %v106, %v92
    %v131 = vsel %vm118, %v113, %v99
    %v134 = vsel %vm123, %v130, 0.0
    %v135 = vsel %vm123, %v131, 0.0
    %v136 = vld [vmem:[#allocation6] sm:$0xff]
    %v137 = vld [vmem:[#allocation6 + $0x8] sm:$0xff]
    %v138 = vld [vmem:[#allocation6 + $0x10] sm:$0xff]
    %v139 = vld [vmem:[#allocation6 + $0x18] sm:$0xff]
    %v140 = vld [vmem:[#allocation6 + $0x20] sm:$0xff]
    %v141 = vld [vmem:[#allocation6 + $0x28] sm:$0xff]
    %v142 = vld [vmem:[#allocation6 + $0x30] sm:$0xff]
    %v143 = vld [vmem:[#allocation6 + $0x38] sm:$0xff]
    %v144 = vld [vmem:[#allocation6 + $0x40] sm:$0xff]
    %v145 = vld [vmem:[#allocation6 + $0x48] sm:$0xff]
    %v146 = vld [vmem:[#allocation6 + $0x50] sm:$0xff]
    %v147 = vld [vmem:[#allocation6 + $0x58] sm:$0xff]
    %v148 = vld [vmem:[#allocation6 + $0x60] sm:$0xff]
    %v149 = vld [vmem:[#allocation6 + $0x68] sm:$0xff]
    %v150 = vld [vmem:[#allocation6 + $0x70] sm:$0xff]
    %v151 = vld [vmem:[#allocation6 + $0x78] sm:$0xff]
    %v152 = vld [vmem:[#allocation6 + $0x80] sm:$0xff]
    %v153 = vld [vmem:[#allocation6 + $0x88] sm:$0xff]
    %v154 = vld [vmem:[#allocation6 + $0x90] sm:$0xff]
    %v155 = vld [vmem:[#allocation6 + $0x98] sm:$0xff]
    %v156 = vld [vmem:[#allocation6 + $0xa0] sm:$0xff]
    %v157 = vld [vmem:[#allocation6 + $0xa8] sm:$0xff]
    %v158 = vld [vmem:[#allocation6 + $0xb0] sm:$0xff]
    %v159 = vld [vmem:[#allocation6 + $0xb8] sm:$0xff]
    %v160 = vld [vmem:[#allocation6 + $0xc0] sm:$0xff]
    %v161 = vld [vmem:[#allocation6 + $0xc8] sm:$0xff]
    %v162 = vld [vmem:[#allocation6 + $0xd0] sm:$0xff]
    %v163 = vld [vmem:[#allocation6 + $0xd8] sm:$0xff]
    %v164 = vld [vmem:[#allocation6 + $0xe0] sm:$0xff]
    %v165 = vld [vmem:[#allocation6 + $0xe8] sm:$0xff]
    %v166 = vld [vmem:[#allocation6 + $0xf0] sm:$0xff]
    %v167 = vld [vmem:[#allocation6 + $0xf8] sm:$0xff]
    %v168 = vld [vmem:[#allocation6 + $0x100] sm:$0xff]
    %v169 = vld [vmem:[#allocation6 + $0x108] sm:$0xff]
    %v170 = vld [vmem:[#allocation6 + $0x110] sm:$0xff]
    %v171 = vld [vmem:[#allocation6 + $0x118] sm:$0xff]
    %v172 = vld [vmem:[#allocation6 + $0x120] sm:$0xff]
    %v173 = vld [vmem:[#allocation6 + $0x128] sm:$0xff]
    %v174 = vld [vmem:[#allocation6 + $0x130] sm:$0xff]
    %v175 = vld [vmem:[#allocation6 + $0x138] sm:$0xff]
    %v176 = vld [vmem:[#allocation6 + $0x140] sm:$0xff]
    %v177 = vld [vmem:[#allocation6 + $0x148] sm:$0xff]
    %v178 = vld [vmem:[#allocation6 + $0x150] sm:$0xff]
    %v179 = vld [vmem:[#allocation6 + $0x158] sm:$0xff]
    %v180 = vld [vmem:[#allocation6 + $0x160] sm:$0xff]
    %v181 = vld [vmem:[#allocation6 + $0x168] sm:$0xff]
    %v182 = vld [vmem:[#allocation6 + $0x170] sm:$0xff]
    %v183 = vld [vmem:[#allocation6 + $0x178] sm:$0xff]
    %v184 = vld [vmem:[#allocation6 + $0x180] sm:$0xff]
    %v185 = vld [vmem:[#allocation6 + $0x188] sm:$0xff]
    %v186 = vld [vmem:[#allocation6 + $0x190] sm:$0xff]
    %v187 = vld [vmem:[#allocation6 + $0x198] sm:$0xff]
    %v188 = vld [vmem:[#allocation6 + $0x1a0] sm:$0xff]
    %v189 = vld [vmem:[#allocation6 + $0x1a8] sm:$0xff]
    %v190 = vld [vmem:[#allocation6 + $0x1b0] sm:$0xff]
    %v191 = vld [vmem:[#allocation6 + $0x1b8] sm:$0xff]
    %v192 = vld [vmem:[#allocation6 + $0x1c0] sm:$0xff]
    %v193 = vld [vmem:[#allocation6 + $0x1c8] sm:$0xff]
    %v194 = vld [vmem:[#allocation6 + $0x1d0] sm:$0xff]
    %v195 = vld [vmem:[#allocation6 + $0x1d8] sm:$0xff]
    %v196 = vld [vmem:[#allocation6 + $0x1e0] sm:$0xff]
    %v197 = vld [vmem:[#allocation6 + $0x1e8] sm:$0xff]
    %v198 = vld [vmem:[#allocation6 + $0x1f0] sm:$0xff]
    %v199 = vld [vmem:[#allocation6 + $0x1f8] sm:$0xff]
    %s200 = scalar_lea.vmem [#allocation6], 512
    %v201 = vld [vmem:[%s200] sm:$0xff]
    %v202 = vld [vmem:[%s200 + $0x8] sm:$0xff]
    %v203 = vld [vmem:[%s200 + $0x10] sm:$0xff]
    %v204 = vld [vmem:[%s200 + $0x18] sm:$0xff]
    %v205 = vld [vmem:[%s200 + $0x20] sm:$0xff]
    %v206 = vld [vmem:[%s200 + $0x28] sm:$0xff]
    %v207 = vld [vmem:[%s200 + $0x30] sm:$0xff]
    %v208 = vld [vmem:[%s200 + $0x38] sm:$0xff]
    %v209 = vld [vmem:[%s200 + $0x40] sm:$0xff]
    %v210 = vld [vmem:[%s200 + $0x48] sm:$0xff]
    %v211 = vld [vmem:[%s200 + $0x50] sm:$0xff]
    %v212 = vld [vmem:[%s200 + $0x58] sm:$0xff]
    %v213 = vld [vmem:[%s200 + $0x60] sm:$0xff]
    %v214 = vld [vmem:[%s200 + $0x68] sm:$0xff]
    %v215 = vld [vmem:[%s200 + $0x70] sm:$0xff]
    %v216 = vld [vmem:[%s200 + $0x78] sm:$0xff]
    %v217 = vld [vmem:[%s200 + $0x80] sm:$0xff]
    %v218 = vld [vmem:[%s200 + $0x88] sm:$0xff]
    %v219 = vld [vmem:[%s200 + $0x90] sm:$0xff]
    %v220 = vld [vmem:[%s200 + $0x98] sm:$0xff]
    %v221 = vld [vmem:[%s200 + $0xa0] sm:$0xff]
    %v222 = vld [vmem:[%s200 + $0xa8] sm:$0xff]
    %v223 = vld [vmem:[%s200 + $0xb0] sm:$0xff]
    %v224 = vld [vmem:[%s200 + $0xb8] sm:$0xff]
    %v225 = vld [vmem:[%s200 + $0xc0] sm:$0xff]
    %v226 = vld [vmem:[%s200 + $0xc8] sm:$0xff]
    %v227 = vld [vmem:[%s200 + $0xd0] sm:$0xff]
    %v228 = vld [vmem:[%s200 + $0xd8] sm:$0xff]
    %v229 = vld [vmem:[%s200 + $0xe0] sm:$0xff]
    %v230 = vld [vmem:[%s200 + $0xe8] sm:$0xff]
    %v231 = vld [vmem:[%s200 + $0xf0] sm:$0xff]
    %v232 = vld [vmem:[%s200 + $0xf8] sm:$0xff]
    %v233 = vld [vmem:[%s200 + $0x100] sm:$0xff]
    %v234 = vld [vmem:[%s200 + $0x108] sm:$0xff]
    %v235 = vld [vmem:[%s200 + $0x110] sm:$0xff]
    %v236 = vld [vmem:[%s200 + $0x118] sm:$0xff]
    %v237 = vld [vmem:[%s200 + $0x120] sm:$0xff]
    %v238 = vld [vmem:[%s200 + $0x128] sm:$0xff]
    %v239 = vld [vmem:[%s200 + $0x130] sm:$0xff]
    %v240 = vld [vmem:[%s200 + $0x138] sm:$0xff]
    %v241 = vld [vmem:[%s200 + $0x140] sm:$0xff]
    %v242 = vld [vmem:[%s200 + $0x148] sm:$0xff]
    %v243 = vld [vmem:[%s200 + $0x150] sm:$0xff]
    %v244 = vld [vmem:[%s200 + $0x158] sm:$0xff]
    %v245 = vld [vmem:[%s200 + $0x160] sm:$0xff]
    %v246 = vld [vmem:[%s200 + $0x168] sm:$0xff]
    %v247 = vld [vmem:[%s200 + $0x170] sm:$0xff]
    %v248 = vld [vmem:[%s200 + $0x178] sm:$0xff]
    %v249 = vld [vmem:[%s200 + $0x180] sm:$0xff]
    %v250 = vld [vmem:[%s200 + $0x188] sm:$0xff]
    %v251 = vld [vmem:[%s200 + $0x190] sm:$0xff]
    %v252 = vld [vmem:[%s200 + $0x198] sm:$0xff]
    %v253 = vld [vmem:[%s200 + $0x1a0] sm:$0xff]
    %v254 = vld [vmem:[%s200 + $0x1a8] sm:$0xff]
    %v255 = vld [vmem:[%s200 + $0x1b0] sm:$0xff]
    %v256 = vld [vmem:[%s200 + $0x1b8] sm:$0xff]
    %v257 = vld [vmem:[%s200 + $0x1c0] sm:$0xff]
    %v258 = vld [vmem:[%s200 + $0x1c8] sm:$0xff]
    %v259 = vld [vmem:[%s200 + $0x1d0] sm:$0xff]
    %v260 = vld [vmem:[%s200 + $0x1d8] sm:$0xff]
    %v261 = vld [vmem:[%s200 + $0x1e0] sm:$0xff]
    %v262 = vld [vmem:[%s200 + $0x1e8] sm:$0xff]
    %v263 = vld [vmem:[%s200 + $0x1f0] sm:$0xff]
    %v264 = vld [vmem:[%s200 + $0x1f8] sm:$0xff]
    %265 = vmatprep.subr.mxu0 %v202
    %266 = vmatpush1.msra.mxu0 %v201
    %267 = vmatprep.subr.mxu0 %v204
    %268 = vmatpush1.msra.mxu0 %v203
    %269 = vmatprep.subr.mxu0 %v206
    %270 = vmatpush1.msra.mxu0 %v205
    %271 = vmatprep.subr.mxu0 %v208
    %272 = vmatpush1.msra.mxu0 %v207
    %273 = vmatprep.subr.mxu0 %v210
    %274 = vmatpush1.msra.mxu0 %v209
    %275 = vmatprep.subr.mxu0 %v212
    %276 = vmatpush1.msra.mxu0 %v211
    %277 = vmatprep.subr.mxu0 %v214
    %278 = vmatpush1.msra.mxu0 %v213
    %279 = vmatprep.subr.mxu0 %v216
    %280 = vmatpush1.msra.mxu0 %v215
    %281 = vmatprep.subr.mxu0 %v218
    %282 = vmatpush1.msra.mxu0 %v217
    %283 = vmatprep.subr.mxu0 %v220
    %284 = vmatpush1.msra.mxu0 %v219
    %285 = vmatprep.subr.mxu0 %v222
    %286 = vmatpush1.msra.mxu0 %v221
    %287 = vmatprep.subr.mxu0 %v224
    %288 = vmatpush1.msra.mxu0 %v223
    %289 = vmatprep.subr.mxu0 %v226
    %290 = vmatpush1.msra.mxu0 %v225
    %291 = vmatprep.subr.mxu0 %v228
    %292 = vmatpush1.msra.mxu0 %v227
    %293 = vmatprep.subr.mxu0 %v230
    %294 = vmatpush1.msra.mxu0 %v229
    %295 = vmatprep.subr.mxu0 %v232
    %296 = vmatpush1.msra.mxu0 %v231
    %297 = vmatprep.subr.mxu0 %v234
    %298 = vmatpush1.msra.mxu0 %v233
    %299 = vmatprep.subr.mxu0 %v236
    %300 = vmatpush1.msra.mxu0 %v235
    %301 = vmatprep.subr.mxu0 %v238
    %302 = vmatpush1.msra.mxu0 %v237
    %303 = vmatprep.subr.mxu0 %v240
    %304 = vmatpush1.msra.mxu0 %v239
    %305 = vmatprep.subr.mxu0 %v242
    %306 = vmatpush1.msra.mxu0 %v241
    %307 = vmatprep.subr.mxu0 %v244
    %308 = vmatpush1.msra.mxu0 %v243
    %309 = vmatprep.subr.mxu0 %v246
    %310 = vmatpush1.msra.mxu0 %v245
    %311 = vmatprep.subr.mxu0 %v248
    %312 = vmatpush1.msra.mxu0 %v247
    %313 = vmatprep.subr.mxu0 %v250
    %314 = vmatpush1.msra.mxu0 %v249
    %315 = vmatprep.subr.mxu0 %v252
    %316 = vmatpush1.msra.mxu0 %v251
    %317 = vmatprep.subr.mxu0 %v254
    %318 = vmatpush1.msra.mxu0 %v253
    %319 = vmatprep.subr.mxu0 %v256
    %320 = vmatpush1.msra.mxu0 %v255
    %321 = vmatprep.subr.mxu0 %v258
    %322 = vmatpush1.msra.mxu0 %v257
    %323 = vmatprep.subr.mxu0 %v260
    %324 = vmatpush1.msra.mxu0 %v259
    %325 = vmatprep.subr.mxu0 %v262
    %326 = vmatpush1.msra.mxu0 %v261
    %327 = vmatprep.subr.mxu0 %v264
    %328 = vmatpush1.msra.mxu0 %v263
    %329 = vmatprep.mubr.f32.mxu0 %v135
    %330 = vmatmul.mubr.f32.gmra.mrb[0].mxu0 %v134
    %v331 = vpop.f32.mrb[0].mxu0
    %v332 = vadd.f32 0.0, %v331
    %v333 = vpop.f32.mrb[0].mxu0
    %v334 = vadd.f32 0.0, %v333
    %335 = vdwg.mxu0
    %336 = vmatprep.subr.mxu0 %v137
    %337 = vmatpush1.msra.mxu0 %v136
    %338 = vmatprep.subr.mxu0 %v139
    %339 = vmatpush1.msra.mxu0 %v138
    %340 = vmatprep.subr.mxu0 %v141
    %341 = vmatpush1.msra.mxu0 %v140
    %342 = vmatprep.subr.mxu0 %v143
    %343 = vmatpush1.msra.mxu0 %v142
    %344 = vmatprep.subr.mxu0 %v145
    %345 = vmatpush1.msra.mxu0 %v144
    %346 = vmatprep.subr.mxu0 %v147
    %347 = vmatpush1.msra.mxu0 %v146
    %348 = vmatprep.subr.mxu0 %v149
    %349 = vmatpush1.msra.mxu0 %v148
    %350 = vmatprep.subr.mxu0 %v151
    %351 = vmatpush1.msra.mxu0 %v150
    %352 = vmatprep.subr.mxu0 %v153
    %353 = vmatpush1.msra.mxu0 %v152
    %354 = vmatprep.subr.mxu0 %v155
    %355 = vmatpush1.msra.mxu0 %v154
    %356 = vmatprep.subr.mxu0 %v157
    %357 = vmatpush1.msra.mxu0 %v156
    %358 = vmatprep.subr.mxu0 %v159
    %359 = vmatpush1.msra.mxu0 %v158
    %360 = vmatprep.subr.mxu0 %v161
    %361 = vmatpush1.msra.mxu0 %v160
    %362 = vmatprep.subr.mxu0 %v163
    %363 = vmatpush1.msra.mxu0 %v162
    %364 = vmatprep.subr.mxu0 %v165
    %365 = vmatpush1.msra.mxu0 %v164
    %366 = vmatprep.subr.mxu0 %v167
    %367 = vmatpush1.msra.mxu0 %v166
    %368 = vmatprep.subr.mxu0 %v169
    %369 = vmatpush1.msra.mxu0 %v168
    %370 = vmatprep.subr.mxu0 %v171
    %371 = vmatpush1.msra.mxu0 %v170
    %372 = vmatprep.subr.mxu0 %v173
    %373 = vmatpush1.msra.mxu0 %v172
    %374 = vmatprep.subr.mxu0 %v175
    %375 = vmatpush1.msra.mxu0 %v174
    %376 = vmatprep.subr.mxu0 %v177
    %377 = vmatpush1.msra.mxu0 %v176
    %378 = vmatprep.subr.mxu0 %v179
    %379 = vmatpush1.msra.mxu0 %v178
    %380 = vmatprep.subr.mxu0 %v181
    %381 = vmatpush1.msra.mxu0 %v180
    %382 = vmatprep.subr.mxu0 %v183
    %383 = vmatpush1.msra.mxu0 %v182
    %384 = vmatprep.subr.mxu0 %v185
    %385 = vmatpush1.msra.mxu0 %v184
    %386 = vmatprep.subr.mxu0 %v187
    %387 = vmatpush1.msra.mxu0 %v186
    %388 = vmatprep.subr.mxu0 %v189
    %389 = vmatpush1.msra.mxu0 %v188
    %390 = vmatprep.subr.mxu0 %v191
    %391 = vmatpush1.msra.mxu0 %v190
    %392 = vmatprep.subr.mxu0 %v193
    %393 = vmatpush1.msra.mxu0 %v192
    %394 = vmatprep.subr.mxu0 %v195
    %395 = vmatpush1.msra.mxu0 %v194
    %396 = vmatprep.subr.mxu0 %v197
    %397 = vmatpush1.msra.mxu0 %v196
    %398 = vmatprep.subr.mxu0 %v199
    %399 = vmatpush1.msra.mxu0 %v198
    %400 = vmatprep.mubr.f32.mxu0 %v125
    %401 = vmatmul.mubr.f32.gmra.mrb[0].mxu0 %v124
    %v402 = vpop.f32.mrb[0].mxu0
    %v403 = vadd.f32 %v332, %v402
    %v404 = vpop.f32.mrb[0].mxu0
    %v405 = vadd.f32 %v334, %v404
    %406 = vdwg.mxu0
    %s407 = sld [smem:[#allocation2]]
    %v408 = vstv %s407
    %v409 = vadd.f32 %v403, %v408
    %v410 = vadd.f32 %v405, %v408
    %v411 = vxor.u32 %v409, 2147483648
    %v412 = vxor.u32 %v410, 2147483648
    %v413 = vmul.f32 %v411, 1.442695
    %v414 = vpow.pop %v413
    %v415 = vmul.f32 %v412, 1.442695
    %v416 = vpow.pop %v415
    %v417 = vadd.f32 %v414, 1.0
    %v418 = vadd.f32 %v416, 1.0
    %v419 = vrcp.pop %v417
    %v420 = vmul.f32 1.0, %v419
    %v421 = vrcp.pop %v418
    %v422 = vmul.f32 1.0, %v421
    %v425 = vcombine.low %v420, %v422
    %v427 = vunpack.c.l.s4 1983009808
    %v428 = vunpack.c.0.s8 %v427
    %v429 = vlaneseq
    %v430 = vshrl.u32 %v429, 7
    %v431 = vsub.s32 %v428, %v430
    %v432 = vrot.slane %v425, %v431
    %434 = vst [vmem:[#allocation8] sm:$0xf] %v432
    // Predicated region
    $region22: #{tpu_custom_call.1} parent=1 // pred_check
      _
    $region23: #{tpu_custom_call.1} parent=1 // pred_check_branch
      %436 = sbr.rel (0) target = $region25
    $region24: #{tpu_custom_call.1} parent=1 // pred_region
      %s438 = ssub.s32 64, 64
      %439 = vsyncadd [#allocation5], %s438
      %s441 = sshll.u32 [#allocation8], 4
      %s442 = int_to_ptr.vmem [resolvable:$true] %s441
      %444 = dma.vmem_to_hbm [thread:$0]  %s442, 64, %s3, [#allocation5]
    $region25: #{tpu_custom_call.1} parent=1 // pred_fallthru
      _
    // Predicated region
    $region26: #{tpu_custom_call.1} parent=1 // pred_check
      _
    $region27: #{tpu_custom_call.1} parent=1 // pred_check_branch
      %446 = sbr.rel (0) target = $region29
    $region28: #{tpu_custom_call.1} parent=1 // pred_region
      %447 = dma.done [#allocation5], 64
    $region29: #{tpu_custom_call.1} parent=1 // pred_fallthru
      _
    %448 = vsyncpa [#allocation4], 1
    %449 = vsyncpa [#allocation7], 1
    %450 = vsyncpa [#allocation5], 1

</llo_original>
